<compile_context>
chip_gen: v5e
topology: v5e:2x2
jax: 0.10.0
libtpu: 0.0.40
codegen_flags: <defaults>
</compile_context>

<pallas_src>
import jax
import jax.numpy as jnp
from jax.experimental import pallas as pl
from jax.experimental.pallas import tpu as pltpu


def _proposal_kernel(labels_ref, xyz_ref, feat_ref, joints_ref, jfeat_ref):
    """One (batch b, N-tile n) grid step.

    labels_ref: (1, K, TN) bf16  -- N on the lane axis (dense 128-lane rows)
    xyz_ref:    (1, TN, 3) bf16
    feat_ref:   (1, TN, C) bf16
    joints_ref: (1, K, 3)  f32   -- resident accumulator across the N axis
    jfeat_ref:  (1, K, C)  f32   -- resident accumulator across the N axis
    """
    n = pl.program_id(1)

    @pl.when(n == 0)
    def _init():
        joints_ref[...] = jnp.zeros_like(joints_ref)
        jfeat_ref[...] = jnp.zeros_like(jfeat_ref)

    lab = labels_ref[0]                      # (K, TN)
    contract = (((1,), (0,)), ((), ()))      # contract over the point axis N
    joints_ref[0] += jax.lax.dot_general(
        lab, xyz_ref[0], contract, preferred_element_type=jnp.float32)
    jfeat_ref[0] += jax.lax.dot_general(
        lab, feat_ref[0], contract, preferred_element_type=jnp.float32)


def _pick_n_tile(n_points, n_tile_max=8192):
    """Return (tile_n, padded_n).

    If N fits in one tile, use it whole (block == full dim, no (8,128)
    constraint).  Otherwise prefer a multiple-of-256 divisor of N; if none
    exists, pad N up to a multiple of the max tile (padding is zeros in the
    labels, so it contributes nothing to the reduction).
    """
    if n_points <= n_tile_max:
        return n_points, n_points
    start = max(256, n_tile_max - (n_tile_max % 256))
    for t in range(start, 255, -256):
        if n_points % t == 0:
            return t, n_points
    t = start
    return t, ((n_points + t - 1) // t) * t


def proposal_module_forward(xyz, features, labels, end_points=None, *,
                            n_tile_max=8192):
    """Pallas implementation of ProposalModule.forward.

    Args:
      xyz:      [B, N, 3]   float
      features: [B, N, C]   float
      labels:   [B, N, K]   float
    Returns:
      end_points dict with 'pred_joints' [B, K, 3] (f32),
      'pred_features' [B, K, C] (f32), 'concatenate_features' [B, K, 3+C] (f32).
    """
    if end_points is None:
        end_points = {}
    B, N, three = xyz.shape
    _, _, C = features.shape
    _, _, K = labels.shape

    # Boundary cast / layout: bf16 inputs (transpose + cast fuse into one XLA
    # pass over labels), labels transposed so N is lane-dense.
    labels_t = jnp.transpose(labels, (0, 2, 1)).astype(jnp.bfloat16)  # [B, K, N]
    xyz_b = xyz.astype(jnp.bfloat16)
    feat_b = features.astype(jnp.bfloat16)

    tn, n_pad = _pick_n_tile(N, n_tile_max)
    if n_pad != N:
        pad = n_pad - N
        labels_t = jnp.pad(labels_t, ((0, 0), (0, 0), (0, pad)))  # zero labels
        xyz_b = jnp.pad(xyz_b, ((0, 0), (0, pad), (0, 0)))
        feat_b = jnp.pad(feat_b, ((0, 0), (0, pad), (0, 0)))
    n_steps = n_pad // tn

    joints, jfeats = pl.pallas_call(
        _proposal_kernel,
        out_shape=(
            jax.ShapeDtypeStruct((B, K, three), jnp.float32),
            jax.ShapeDtypeStruct((B, K, C), jnp.float32),
        ),
        grid_spec=pltpu.PrefetchScalarGridSpec(
            num_scalar_prefetch=0,
            grid=(B, n_steps),  # B parallel (megacore), N reduction last
            in_specs=[
                pl.BlockSpec((1, K, tn), lambda b, n: (b, 0, n)),
                pl.BlockSpec((1, tn, three), lambda b, n: (b, n, 0)),
                pl.BlockSpec((1, tn, C), lambda b, n: (b, n, 0)),
            ],
            out_specs=[
                # Same block index across n -> outputs stay resident in VMEM
                # and serve as f32 accumulators.
                pl.BlockSpec((1, K, three), lambda b, n: (b, 0, 0)),
                pl.BlockSpec((1, K, C), lambda b, n: (b, 0, 0)),
            ],
        ),
        compiler_params=pltpu.CompilerParams(
            dimension_semantics=("parallel", "arbitrary"),
        ),
    )(labels_t, xyz_b, feat_b)

    end_points['pred_joints'] = joints
    end_points['pred_features'] = jfeats
    end_points['concatenate_features'] = jnp.concatenate([joints, jfeats], axis=-1)
    return end_points


def _reference(xyz, features, labels):
    """Same math as the PyTorch module, on the bf16-quantized inputs the
    kernel consumes (accumulation in f32, so tolerances stay tight)."""
    lab32 = labels.astype(jnp.bfloat16).astype(jnp.float32)
    xyz32 = xyz.astype(jnp.bfloat16).astype(jnp.float32)
    feat32 = features.astype(jnp.bfloat16).astype(jnp.float32)
    ref_joints = jnp.einsum('bnk,bnd->bkd', lab32, xyz32)
    ref_feats = jnp.einsum('bnk,bnd->bkd', lab32, feat32)
    return ref_joints, ref_feats


def _check(end_points, xyz, features, labels):
    B, N, _ = xyz.shape
    _, _, C = features.shape
    _, _, K = labels.shape
    ref_joints, ref_feats = _reference(xyz, features, labels)
    ref_cat = jnp.concatenate([ref_joints, ref_feats], axis=-1)
    assert end_points['pred_joints'].shape == (B, K, 3)
    assert end_points['pred_features'].shape == (B, K, C)
    assert end_points['concatenate_features'].shape == (B, K, 3 + C)
    assert jnp.allclose(end_points['pred_joints'], ref_joints, atol=2e-3, rtol=2e-3)
    assert jnp.allclose(end_points['pred_features'], ref_feats, atol=2e-3, rtol=2e-3)
    assert jnp.allclose(end_points['concatenate_features'], ref_cat, atol=2e-3, rtol=2e-3)


if __name__ == "__main__":
    # Small shapes consistent with the module (N points, K=24 parts, C=128 feat dim)
    B, K, C = 2, 24, 128
    key = jax.random.PRNGKey(0)

    def make_inputs(n_points, key):
        k1, k2, k3 = jax.random.split(key, 3)
        xyz = jax.random.normal(k1, (B, n_points, 3), dtype=jnp.float32)
        features = jax.random.normal(k2, (B, n_points, C), dtype=jnp.float32)
        labels = jax.random.uniform(k3, (B, n_points, K), dtype=jnp.float32)
        return xyz, features, labels

    # 1) Single-tile path (N fits in one tile).
    xyz, features, labels = make_inputs(256, key)
    ep = proposal_module_forward(xyz, features, labels, {})
    jax.block_until_ready(ep['concatenate_features'])
    _check(ep, xyz, features, labels)

    # 2) Multi-tile reduction path (accumulator across the N grid axis).
    xyz2, features2, labels2 = make_inputs(512, jax.random.PRNGKey(1))
    ep2 = proposal_module_forward(xyz2, features2, labels2, {}, n_tile_max=256)
    jax.block_until_ready(ep2['concatenate_features'])
    _check(ep2, xyz2, features2, labels2)

    # 3) Padding path (N not divisible by the tile; zero-padded labels).
    xyz3, features3, labels3 = make_inputs(300, jax.random.PRNGKey(2))
    ep3 = proposal_module_forward(xyz3, features3, labels3, {}, n_tile_max=256)
    jax.block_until_ready(ep3['concatenate_features'])
    _check(ep3, xyz3, features3, labels3)

    print("KERNEL_OK")
</pallas_src>

<mosaic_0001>
module attributes {stable_mosaic.version = 11 : i64} {
  func.func @_proposal_kernel(%arg0: i32, %arg1: i32, %arg2: memref<1x24x256xbf16, #tpu.memory_space<vmem>>, %arg3: memref<1x256x3xbf16, #tpu.memory_space<vmem>>, %arg4: memref<1x256x128xbf16, #tpu.memory_space<vmem>>, %arg5: memref<1x24x3xf32, #tpu.memory_space<vmem>>, %arg6: memref<1x24x128xf32, #tpu.memory_space<vmem>>) attributes {dimension_semantics = [#tpu.dimension_semantics<parallel>, #tpu.dimension_semantics<arbitrary>], iteration_bounds = array<i64: 2, 1>, scalar_prefetch = 0 : i64, scratch_operands = 0 : i64, tpu.core_type = #tpu.core_type<tc>, window_params = [{transform_indices = @transform_0, window_bounds = array<i64: 1, 24, 256>}, {transform_indices = @transform_1, window_bounds = array<i64: 1, 256, 3>}, {transform_indices = @transform_2, window_bounds = array<i64: 1, 256, 128>}, {transform_indices = @transform_3, window_bounds = array<i64: 1, 24, 3>}, {transform_indices = @transform_4, window_bounds = array<i64: 1, 24, 128>}]} {
    %c0_i32 = arith.constant 0 : i32
    %0 = arith.cmpi eq, %arg1, %c0_i32 : i32
    %1 = arith.extui %0 : i1 to i32
    %c0_i32_0 = arith.constant 0 : i32
    %2 = arith.cmpi ne, %1, %c0_i32_0 : i32
    scf.if %2 {
      %cst_22 = arith.constant 0.000000e+00 : f32
      %23 = vector.broadcast %cst_22 : f32 to vector<1x24x3xf32>
      %c0_23 = arith.constant 0 : index
      %c0_24 = arith.constant 0 : index
      %c0_25 = arith.constant 0 : index
      %24 = vector.load %arg5[%c0_23, %c0_24, %c0_25] : memref<1x24x3xf32, #tpu.memory_space<vmem>>, vector<1x24x3xf32>
      tpu.vector_store %arg5[%c0_23, %c0_24, %c0_25], %23 {strides = array<i32>} : memref<1x24x3xf32, #tpu.memory_space<vmem>>, vector<1x24x3xf32>,
      %cst_26 = arith.constant 0.000000e+00 : f32
      %25 = vector.broadcast %cst_26 : f32 to vector<1x24x128xf32>
      %c0_27 = arith.constant 0 : index
      %c0_28 = arith.constant 0 : index
      %c0_29 = arith.constant 0 : index
      %26 = vector.load %arg6[%c0_27, %c0_28, %c0_29] : memref<1x24x128xf32, #tpu.memory_space<vmem>>, vector<1x24x128xf32>
      tpu.vector_store %arg6[%c0_27, %c0_28, %c0_29], %25 {strides = array<i32>} : memref<1x24x128xf32, #tpu.memory_space<vmem>>, vector<1x24x128xf32>,
    } else {
    }
    %c0 = arith.constant 0 : index
    %c0_1 = arith.constant 0 : index
    %c0_2 = arith.constant 0 : index
    %3 = vector.load %arg2[%c0, %c0_1, %c0_2] : memref<1x24x256xbf16, #tpu.memory_space<vmem>>, vector<1x24x256xbf16>
    %4 = vector.shape_cast %3 : vector<1x24x256xbf16> to vector<24x256xbf16>
    %c0_3 = arith.constant 0 : index
    %c0_4 = arith.constant 0 : index
    %c0_5 = arith.constant 0 : index
    %5 = vector.load %arg5[%c0_3, %c0_4, %c0_5] : memref<1x24x3xf32, #tpu.memory_space<vmem>>, vector<1x24x3xf32>
    %6 = vector.shape_cast %5 : vector<1x24x3xf32> to vector<24x3xf32>
    %c0_6 = arith.constant 0 : index
    %c0_7 = arith.constant 0 : index
    %c0_8 = arith.constant 0 : index
    %7 = vector.load %arg3[%c0_6, %c0_7, %c0_8] : memref<1x256x3xbf16, #tpu.memory_space<vmem>>, vector<1x256x3xbf16>
    %8 = vector.shape_cast %7 : vector<1x256x3xbf16> to vector<256x3xbf16>
    %cst = arith.constant dense<0.000000e+00> : vector<24x3xf32>
    %9 = tpu.matmul %4, %8, %cst {dimension_numbers = #tpu.dot_dimension_numbers<[1], [0], [0], [1], [0, 0, 1, 1], [], []>} : vector<24x256xbf16>, vector<256x3xbf16>, vector<24x3xf32> -> vector<24x3xf32>
    %10 = arith.addf %6, %9 : vector<24x3xf32>
    %c0_9 = arith.constant 0 : index
    %c0_10 = arith.constant 0 : index
    %c0_11 = arith.constant 0 : index
    %11 = vector.load %arg5[%c0_9, %c0_10, %c0_11] : memref<1x24x3xf32, #tpu.memory_space<vmem>>, vector<1x24x3xf32>
    %12 = vector.shape_cast %11 : vector<1x24x3xf32> to vector<24x3xf32>
    %13 = vector.shape_cast %10 : vector<24x3xf32> to vector<1x24x3xf32>
    tpu.vector_store %arg5[%c0_9, %c0_10, %c0_11], %13 {strides = array<i32>} : memref<1x24x3xf32, #tpu.memory_space<vmem>>, vector<1x24x3xf32>,
    %c0_12 = arith.constant 0 : index
    %c0_13 = arith.constant 0 : index
    %c0_14 = arith.constant 0 : index
    %14 = vector.load %arg6[%c0_12, %c0_13, %c0_14] : memref<1x24x128xf32, #tpu.memory_space<vmem>>, vector<1x24x128xf32>
    %15 = vector.shape_cast %14 : vector<1x24x128xf32> to vector<24x128xf32>
    %c0_15 = arith.constant 0 : index
    %c0_16 = arith.constant 0 : index
    %c0_17 = arith.constant 0 : index
    %16 = vector.load %arg4[%c0_15, %c0_16, %c0_17] : memref<1x256x128xbf16, #tpu.memory_space<vmem>>, vector<1x256x128xbf16>
    %17 = vector.shape_cast %16 : vector<1x256x128xbf16> to vector<256x128xbf16>
    %cst_18 = arith.constant dense<0.000000e+00> : vector<24x128xf32>
    %18 = tpu.matmul %4, %17, %cst_18 {dimension_numbers = #tpu.dot_dimension_numbers<[1], [0], [0], [1], [0, 0, 1, 1], [], []>} : vector<24x256xbf16>, vector<256x128xbf16>, vector<24x128xf32> -> vector<24x128xf32>
    %19 = arith.addf %15, %18 : vector<24x128xf32>
    %c0_19 = arith.constant 0 : index
    %c0_20 = arith.constant 0 : index
    %c0_21 = arith.constant 0 : index
    %20 = vector.load %arg6[%c0_19, %c0_20, %c0_21] : memref<1x24x128xf32, #tpu.memory_space<vmem>>, vector<1x24x128xf32>
    %21 = vector.shape_cast %20 : vector<1x24x128xf32> to vector<24x128xf32>
    %22 = vector.shape_cast %19 : vector<24x128xf32> to vector<1x24x128xf32>
    tpu.vector_store %arg6[%c0_19, %c0_20, %c0_21], %22 {strides = array<i32>} : memref<1x24x128xf32, #tpu.memory_space<vmem>>, vector<1x24x128xf32>,
    return
  }
  func.func @transform_0(%arg0: i32, %arg1: i32) -> (i32, i32, i32) {
    %c0_i32 = arith.constant 0 : i32
    %c0_i32_0 = arith.constant 0 : i32
    return %arg0, %c0_i32, %arg1 : i32, i32, i32
  }
  func.func @transform_1(%arg0: i32, %arg1: i32) -> (i32, i32, i32) {
    %c0_i32 = arith.constant 0 : i32
    %c0_i32_0 = arith.constant 0 : i32
    return %arg0, %arg1, %c0_i32 : i32, i32, i32
  }
  func.func @transform_2(%arg0: i32, %arg1: i32) -> (i32, i32, i32) {
    %c0_i32 = arith.constant 0 : i32
    %c0_i32_0 = arith.constant 0 : i32
    return %arg0, %arg1, %c0_i32 : i32, i32, i32
  }
  func.func @transform_3(%arg0: i32, %arg1: i32) -> (i32, i32, i32) {
    %c0_i32 = arith.constant 0 : i32
    %c0_i32_0 = arith.constant 0 : i32
    %c0_i32_1 = arith.constant 0 : i32
    return %arg0, %c0_i32, %c0_i32_0 : i32, i32, i32
  }
  func.func @transform_4(%arg0: i32, %arg1: i32) -> (i32, i32, i32) {
    %c0_i32 = arith.constant 0 : i32
    %c0_i32_0 = arith.constant 0 : i32
    %c0_i32_1 = arith.constant 0 : i32
    return %arg0, %c0_i32, %c0_i32_0 : i32, i32, i32
  }
}

</mosaic_0001>

<llo_original>
// kernel: tpu_custom_call.1
$region0: #{tpu_custom_call.1}
  #allocation0 [shape = 'u32[]', space=smem, size = 0x4, offset = 0x4, fixed_abs, tag = 'smem constant byte address 0x4 - core index']
  #allocation1 [shape = 'u32[72,128]{1,0:T(1,128)}', space=vmem, size = 0x9000, scoped, tag = 'internal scratch']
  %s0 = inlined_call_operand.hbm [shape: bf16[2,24,256], index: 0, kind: input, shape index: {}]
  %s1 = inlined_call_operand.vmem [shape: bf16[2,256,3], index: 1, kind: input, shape index: {}]
  %s2 = inlined_call_operand.vmem [shape: bf16[2,256,128], index: 2, kind: input, shape index: {}]
  %s3 = inlined_call_operand.vmem [shape: f32[2,24,3], index: 3, kind: output, shape index: {0}]
  %s4 = inlined_call_operand.hbm [shape: f32[2,24,128], index: 4, kind: output, shape index: {1}]
  %5 = xla_tuple %s3, %s4
  %s6 = sld [smem:[#allocation0]]
  $region61: #{tpu_custom_call.1} parent=0
    _
  %s8 = ssub.s32 1, %s6
  %s9 = scalar_select 0, %s8, %s6
  $region1: #{tpu_custom_call.1} parent=0
    #allocation2 [shape = 'u8[24576]{0}', space=vmem, size = 0x6000, scoped, tag = 'input window, operand 0']
    #allocation3 [shape = 's32[2]{0}', space=sflag, size = 0x8, scoped, tag = 'scoped memory for tpu_custom_call.1']
    #allocation4 [shape = 's32[2]{0}', space=sflag, size = 0x8, scoped, tag = 'scoped memory for tpu_custom_call.1']
    #allocation5 [shape = 'u8[24576]{0}', space=vmem, size = 0x6000, scoped, tag = 'output window, operand 1']
    %10 = vsyncpa [#allocation3], 0
    %s11 = scalar_lea.sflag [#allocation3], 1
    %12 = vsyncpa %s11, 0
    %13 = vsyncpa [#allocation4], 0
    %s14 = scalar_lea.sflag [#allocation4], 1
    %15 = vsyncpa %s14, 0
    loop: start=0, step=1, limit=4
    $region2: #{tpu_custom_call.1} parent=1 // loop_pre_header
      _
    $region3: #{tpu_custom_call.1} parent=1 // loop_header
      %s17 = sphi 0, %s21
      %p18 = scmp.ge.s32.totalorder %s17, 4
      %s24 = sphi 0, %s36
      %s25 = sphi 0, %s32
      %s26 = sphi 0, %s24
      %s27 = sphi 0, %s25
      %s28 = sphi 0, %s26
      %s29 = sphi 0, %s27
      %s41 = sphi 0, %s43
      %s44 = sphi 0, %s41
      %s45 = sphi 0, %s44
      %s61 = sphi 0, %s45
      %s69 = sphi 0, %s71
      %s72 = sphi 0, %s69
      %s73 = sphi 0, %s72
      %s89 = sphi 0, %s73
      %s97 = sphi 0, %s99
      %s100 = sphi 0, %s97
      %s101 = sphi 0, %s100
      %s117 = sphi 0, %s101
      %s123 = sphi 0, %s125
      %s126 = sphi 0, %s123
      %s127 = sphi 0, %s126
      %s143 = sphi 0, %s127
      %s149 = sphi 0, %s151
      %s152 = sphi 0, %s149
      %s153 = sphi 0, %s152
      %s169 = sphi 0, %s153
    $region4: #{tpu_custom_call.1} parent=1 // loop_header_branch
      %20 = sbr.rel (%p18) target = $region8
    $region5: #{tpu_custom_call.1} parent=1 // loop_body
      %s22 = ssub.s32 %s17, 1
      %s23 = ssub.s32 %s17, 2
      %s30 = sadd.s32 1, %s25
      %p31 = scmp.ge.s32.totalorder %s30, 1
      %s32 = scalar_select %p31, 0, %s30
      %s33 = sadd.s32 1, %s24
      %s34 = scalar_select %p31, %s33, %s24
      %p35 = scmp.ge.s32.totalorder %s34, 2
      %s36 = scalar_select %p35, 0, %s34
      %s37 = ssub.s32 %s24, %s36
      %s38 = ssub.s32 %s25, %s32
      %s39 = sor.u32 %s37, %s38
      %p40 = scmp.eq.s32.totalorder %s39, 0
      %s42 = sadd.s32 %s41, 1
      %s43 = scalar_select %p40, %s41, %s42
      %p46 = pneg %p40
      %p47 = scmp.eq.s32.totalorder %s17, 1
      %p48 = por %p46, %p47
      %p49 = scmp.ne.s32.totalorder %s41, %s44
      %p50 = scmp.eq.s32.totalorder %s17, 0
      %p51 = por %p49, %p50
      %p52 = scmp.ne.s32.totalorder %s41, %s44
      %p53 = scmp.eq.s32.totalorder %s22, 1
      %p54 = por %p52, %p53
      %p55 = scmp.ne.s32.totalorder %s44, %s45
      %p56 = scmp.eq.s32.totalorder %s22, 0
      %p57 = por %p55, %p56
      %p58 = scmp.ne.s32.totalorder %s44, %s45
      %p59 = scmp.eq.s32.totalorder %s23, 1
      %p60 = por %p58, %p59
      %p62 = scmp.ne.s32.totalorder %s45, %s61
      %p63 = scmp.eq.s32.totalorder %s23, 0
      %p64 = por %p62, %p63
      %s65 = ssub.s32 %s24, %s36
      %s66 = ssub.s32 %s25, %s32
      %s67 = sor.u32 %s65, %s66
      %p68 = scmp.eq.s32.totalorder %s67, 0
      %s70 = sadd.s32 %s69, 1
      %s71 = scalar_select %p68, %s69, %s70
      %p74 = pneg %p68
      %p75 = scmp.eq.s32.totalorder %s17, 1
      %p76 = por %p74, %p75
      %p77 = scmp.ne.s32.totalorder %s69, %s72
      %p78 = scmp.eq.s32.totalorder %s17, 0
      %p79 = por %p77, %p78
      %p80 = scmp.ne.s32.totalorder %s69, %s72
      %p81 = scmp.eq.s32.totalorder %s22, 1
      %p82 = por %p80, %p81
      %p83 = scmp.ne.s32.totalorder %s72, %s73
      %p84 = scmp.eq.s32.totalorder %s22, 0
      %p85 = por %p83, %p84
      %p86 = scmp.ne.s32.totalorder %s72, %s73
      %p87 = scmp.eq.s32.totalorder %s23, 1
      %p88 = por %p86, %p87
      %p90 = scmp.ne.s32.totalorder %s73, %s89
      %p91 = scmp.eq.s32.totalorder %s23, 0
      %p92 = por %p90, %p91
      %s93 = ssub.s32 %s24, %s36
      %s94 = ssub.s32 %s25, %s32
      %s95 = sor.u32 %s93, %s94
      %p96 = scmp.eq.s32.totalorder %s95, 0
      %s98 = sadd.s32 %s97, 1
      %s99 = scalar_select %p96, %s97, %s98
      %p102 = pneg %p96
      %p103 = scmp.eq.s32.totalorder %s17, 1
      %p104 = por %p102, %p103
      %p105 = scmp.ne.s32.totalorder %s97, %s100
      %p106 = scmp.eq.s32.totalorder %s17, 0
      %p107 = por %p105, %p106
      %p108 = scmp.ne.s32.totalorder %s97, %s100
      %p109 = scmp.eq.s32.totalorder %s22, 1
      %p110 = por %p108, %p109
      %p111 = scmp.ne.s32.totalorder %s100, %s101
      %p112 = scmp.eq.s32.totalorder %s22, 0
      %p113 = por %p111, %p112
      %p114 = scmp.ne.s32.totalorder %s100, %s101
      %p115 = scmp.eq.s32.totalorder %s23, 1
      %p116 = por %p114, %p115
      %p118 = scmp.ne.s32.totalorder %s101, %s117
      %p119 = scmp.eq.s32.totalorder %s23, 0
      %p120 = por %p118, %p119
      %s121 = ssub.s32 %s24, %s36
      %p122 = scmp.eq.s32.totalorder %s121, 0
      %s124 = sadd.s32 %s123, 1
      %s125 = scalar_select %p122, %s123, %s124
      %p128 = pneg %p122
      %p129 = scmp.eq.s32.totalorder %s17, 1
      %p130 = por %p128, %p129
      %p131 = scmp.ne.s32.totalorder %s123, %s126
      %p132 = scmp.eq.s32.totalorder %s17, 0
      %p133 = por %p131, %p132
      %p134 = scmp.ne.s32.totalorder %s123, %s126
      %p135 = scmp.eq.s32.totalorder %s22, 1
      %p136 = por %p134, %p135
      %p137 = scmp.ne.s32.totalorder %s126, %s127
      %p138 = scmp.eq.s32.totalorder %s22, 0
      %p139 = por %p137, %p138
      %p140 = scmp.ne.s32.totalorder %s126, %s127
      %p141 = scmp.eq.s32.totalorder %s23, 1
      %p142 = por %p140, %p141
      %p144 = scmp.ne.s32.totalorder %s127, %s143
      %p145 = scmp.eq.s32.totalorder %s23, 0
      %p146 = por %p144, %p145
      %s147 = ssub.s32 %s24, %s36
      %p148 = scmp.eq.s32.totalorder %s147, 0
      %s150 = sadd.s32 %s149, 1
      %s151 = scalar_select %p148, %s149, %s150
      %p154 = pneg %p148
      %p155 = scmp.eq.s32.totalorder %s17, 1
      %p156 = por %p154, %p155
      %p157 = scmp.ne.s32.totalorder %s149, %s152
      %p158 = scmp.eq.s32.totalorder %s17, 0
      %p159 = por %p157, %p158
      %p160 = scmp.ne.s32.totalorder %s149, %s152
      %p161 = scmp.eq.s32.totalorder %s22, 1
      %p162 = por %p160, %p161
      %p163 = scmp.ne.s32.totalorder %s152, %s153
      %p164 = scmp.eq.s32.totalorder %s22, 0
      %p165 = por %p163, %p164
      %p166 = scmp.ne.s32.totalorder %s152, %s153
      %p167 = scmp.eq.s32.totalorder %s23, 1
      %p168 = por %p166, %p167
      %p170 = scmp.ne.s32.totalorder %s153, %s169
      %p171 = scmp.eq.s32.totalorder %s23, 0
      %p172 = por %p170, %p171
      %p173 = scmp.le.s32.totalorder 1, %s17
      %p174 = scmp.lt.s32.totalorder %s17, 3
      %p175 = pnand %p173, %p174
      %p176 = pneg %p175
      // Predicated region
      $region9: #{tpu_custom_call.1} parent=5 // pred_check
        _
      $region10: #{tpu_custom_call.1} parent=5 // pred_check_branch
        %178 = sbr.rel (%p175) target = $region12
      $region11: #{tpu_custom_call.1} parent=5 // pred_region
        %s179 = ssub.s32 %s17, 1
      $region12: #{tpu_custom_call.1} parent=5 // pred_fallthru
        _
      %p180 = scmp.lt.s32.totalorder %s17, 2
      // Predicated region
      $region13: #{tpu_custom_call.1} parent=5 // pred_check
        %p181 = pneg %p180
      $region14: #{tpu_custom_call.1} parent=5 // pred_check_branch
        %183 = sbr.rel (%p181) target = $region16
      $region15: #{tpu_custom_call.1} parent=5 // pred_region
        // Predicated region
        $region17: #{tpu_custom_call.1} parent=15 // pred_check
          %p184 = pneg %p51
        $region18: #{tpu_custom_call.1} parent=15 // pred_check_branch
          %186 = sbr.rel (%p184) target = $region20
        $region19: #{tpu_custom_call.1} parent=15 // pred_region
          %s187 = sand.u32 %s41, 1
          %s188 = scalar_lea.sflag [#allocation3], %s187
          %s189 = sand.u32 %s41, 1
          %s190 = smul.addr %s189, 24
          %s191 = scalar_lea.vmem [#allocation2], %s190
          %s192 = smul.u32 2, %s25
          %194 = vsyncadd %s188, 0
          %s195 = smul.addr %s24, 6
          %s196 = sadd.s32 %s192, %s195
          %s197 = smul.addr %s196, 4
          %s198 = scalar_lea.hbm %s0, %s197
          %s199 = sshll.u32 %s198, 4
          %s200 = int_to_ptr.hbm [resolvable:$true] %s199
          %s201 = sshll.u32 %s191, 4
          %s202 = int_to_ptr.vmem [resolvable:$true] %s201
          %207 = dma.hbm_to_vmem [thread:$0]  %s200, 384, %s202, %s188, 128, 128, 8
        $region20: #{tpu_custom_call.1} parent=15 // pred_fallthru
          _
        // Predicated region
        $region21: #{tpu_custom_call.1} parent=15 // pred_check
          %p208 = pneg %p79
        $region22: #{tpu_custom_call.1} parent=15 // pred_check_branch
          %210 = sbr.rel (%p208) target = $region24
        $region23: #{tpu_custom_call.1} parent=15 // pred_region
          %s211 = smul.u32 32, %s25
          %p212 = scmp.lt.s32.totalorder %s24, 1
          %s213 = scalar_select %p212, %s24, 1
          %p214 = scmp.lt.s32.totalorder %s211, 31
          %s215 = scalar_select %p214, %s211, 31
          %s216 = smul.addr %s213, 32
          %s217 = sadd.s32 %s215, %s216
          %s218 = smul.addr %s217, 4
          %s219 = scalar_lea.vmem %s1, %s218
          %s220 = smul.u32 32, %s25
        $region24: #{tpu_custom_call.1} parent=15 // pred_fallthru
          _
        // Predicated region
        $region25: #{tpu_custom_call.1} parent=15 // pred_check
          %p221 = pneg %p107
        $region26: #{tpu_custom_call.1} parent=15 // pred_check_branch
          %223 = sbr.rel (%p221) target = $region28
        $region27: #{tpu_custom_call.1} parent=15 // pred_region
          %s224 = smul.u32 32, %s25
          %p225 = scmp.lt.s32.totalorder %s24, 1
          %s226 = scalar_select %p225, %s24, 1
          %p227 = scmp.lt.s32.totalorder %s224, 31
          %s228 = scalar_select %p227, %s224, 31
          %s229 = smul.addr %s226, 32
          %s230 = sadd.s32 %s228, %s229
          %s231 = smul.addr %s230, 4
          %s232 = scalar_lea.vmem %s2, %s231
          %s233 = smul.u32 32, %s25
        $region28: #{tpu_custom_call.1} parent=15 // pred_fallthru
          _
      $region16: #{tpu_custom_call.1} parent=5 // pred_fallthru
        _
      %p234 = scmp.le.s32.totalorder 1, %s17
      %p235 = scmp.lt.s32.totalorder %s17, 3
      %p236 = pnand %p234, %p235
      %p237 = pneg %p236
      // Predicated region
      $region29: #{tpu_custom_call.1} parent=5 // pred_check
        _
      $region30: #{tpu_custom_call.1} parent=5 // pred_check_branch
        %239 = sbr.rel (%p236) target = $region32
      $region31: #{tpu_custom_call.1} parent=5 // pred_region
        %s240 = ssub.s32 %s17, 1
        %s241 = sand.u32 %s44, 1
        %s242 = scalar_lea.sflag [#allocation3], %s241
        %s243 = sand.u32 %s44, 1
        %s244 = smul.addr %s243, 24
        %s245 = scalar_lea.vmem [#allocation2], %s244
        // Predicated region
        $region33: #{tpu_custom_call.1} parent=31 // pred_check
          %p246 = pneg %p57
        $region34: #{tpu_custom_call.1} parent=31 // pred_check_branch
          %248 = sbr.rel (%p246) target = $region36
        $region35: #{tpu_custom_call.1} parent=31 // pred_region
          %250 = dma.done %s242, 384
        $region36: #{tpu_custom_call.1} parent=31 // pred_fallthru
          _
        %s251 = sand.u32 %s44, 1
        %s252 = scalar_lea.sflag [#allocation3], %s251
        %s253 = sand.u32 %s44, 1
        %s254 = smul.addr %s253, 24
        %s255 = scalar_lea.vmem [#allocation2], %s254
        %p256 = pneg %p57
        %p257 = pneg %p54
        %s258 = smul.u32 32, %s27
        %p259 = scmp.lt.s32.totalorder %s26, 1
        %s260 = scalar_select %p259, %s26, 1
        %p261 = scmp.lt.s32.totalorder %s258, 31
        %s262 = scalar_select %p261, %s258, 31
        %s263 = smul.addr %s260, 32
        %s264 = sadd.s32 %s262, %s263
        %s265 = smul.addr %s264, 4
        %s266 = scalar_lea.vmem %s1, %s265
        %p267 = pneg %p85
        %p268 = pneg %p82
        %s269 = smul.u32 32, %s27
        %p270 = scmp.lt.s32.totalorder %s26, 1
        %s271 = scalar_select %p270, %s26, 1
        %p272 = scmp.lt.s32.totalorder %s269, 31
        %s273 = scalar_select %p272, %s269, 31
        %s274 = smul.addr %s271, 32
        %s275 = sadd.s32 %s273, %s274
        %s276 = smul.addr %s275, 4
        %s277 = scalar_lea.vmem %s2, %s276
        %p278 = pneg %p113
        %p279 = pneg %p110
        %p280 = pneg %p139
        %p281 = pneg %p136
        %p282 = scmp.lt.s32.totalorder %s26, 1
        %s283 = scalar_select %p282, %s26, 1
        %s284 = smul.addr %s283, 3
        %s285 = smul.addr %s284, 8
        %s286 = scalar_lea.vmem %s3, %s285
        %p287 = pneg %p165
        %p288 = pneg %p162
        %s289 = sand.u32 %s152, 1
        %s290 = scalar_lea.sflag [#allocation4], %s289
        %s291 = sand.u32 %s152, 1
        %s292 = smul.addr %s291, 24
        %s293 = scalar_lea.vmem [#allocation5], %s292
        %s294 = smul.u32 2, %s27
        %s295 = smul.u32 32, %s27
        %p296 = scmp.lt.s32.totalorder %s26, 1
        %s297 = scalar_select %p296, %s26, 1
        %p298 = scmp.lt.s32.totalorder %s295, 31
        %s299 = scalar_select %p298, %s295, 31
        %s300 = smul.addr %s297, 32
        %s301 = sadd.s32 %s299, %s300
        %s302 = smul.addr %s301, 4
        %s303 = scalar_lea.vmem %s1, %s302
        %s304 = smul.u32 32, %s27
        %s305 = smul.u32 32, %s27
        %p306 = scmp.lt.s32.totalorder %s26, 1
        %s307 = scalar_select %p306, %s26, 1
        %p308 = scmp.lt.s32.totalorder %s305, 31
        %s309 = scalar_select %p308, %s305, 31
        %s310 = smul.addr %s307, 32
        %s311 = sadd.s32 %s309, %s310
        %s312 = smul.addr %s311, 4
        %s313 = scalar_lea.vmem %s2, %s312
        %s314 = smul.u32 32, %s27
        %p315 = scmp.lt.s32.totalorder %s26, 1
        %s316 = scalar_select %p315, %s26, 1
        %s317 = smul.addr %s316, 3
        %s318 = smul.addr %s317, 8
        %s319 = scalar_lea.vmem %s3, %s318
        %p320 = scmp.eq.s32.totalorder %s27, 0
        // Predicated region
        $region37: #{tpu_custom_call.1} parent=31 // pred_check
          %p321 = pneg %p320
        $region38: #{tpu_custom_call.1} parent=31 // pred_check_branch
          %323 = sbr.rel (%p321) target = $region40
        $region39: #{tpu_custom_call.1} parent=31 // pred_region
          %vm324 = vcmask 23552
          %325 = vst.msk [vmem:[%s319] sm:$0xff] %vm324, 0.0
          %326 = vst.msk [vmem:[%s319 + $0x8] sm:$0xff] %vm324, 0.0
          %327 = vst.msk [vmem:[%s319 + $0x10] sm:$0xff] %vm324, 0.0
          %328 = vst [vmem:[%s293] sm:$0xff] 0.0
          %329 = vst [vmem:[%s293 + $0x8] sm:$0xff] 0.0
          %330 = vst [vmem:[%s293 + $0x10] sm:$0xff] 0.0
        $region40: #{tpu_custom_call.1} parent=31 // pred_fallthru
          _
        %v331 = vld [vmem:[%s245] sm:$0xff]
        %v332 = vld [vmem:[%s245 + $0x8] sm:$0xff]
        %v333 = vld [vmem:[%s245 + $0x10] sm:$0xff]
        %v334 = vld [vmem:[%s319] sm:$0xff]
        %v335 = vld [vmem:[%s319 + $0x8] sm:$0xff]
        %v336 = vld [vmem:[%s319 + $0x10] sm:$0xff]
        %v337 = vld [vmem:[%s303] sm:$0xf]
        %v338 = vld [vmem:[%s303 + $0x4] sm:$0xf]
        %v339 = vld [vmem:[%s303 + $0x8] sm:$0xf]
        %v340 = vld [vmem:[%s303 + $0xc] sm:$0xf]
        %v341 = vld [vmem:[%s303 + $0x10] sm:$0xf]
        %v342 = vld [vmem:[%s303 + $0x14] sm:$0xf]
        %v343 = vld [vmem:[%s303 + $0x18] sm:$0xf]
        %v344 = vld [vmem:[%s303 + $0x1c] sm:$0xf]
        %v345 = vld [vmem:[%s303 + $0x20] sm:$0xf]
        %v346 = vld [vmem:[%s303 + $0x24] sm:$0xf]
        %v347 = vld [vmem:[%s303 + $0x28] sm:$0xf]
        %v348 = vld [vmem:[%s303 + $0x2c] sm:$0xf]
        %v349 = vld [vmem:[%s303 + $0x30] sm:$0xf]
        %v350 = vld [vmem:[%s303 + $0x34] sm:$0xf]
        %v351 = vld [vmem:[%s303 + $0x38] sm:$0xf]
        %v352 = vld [vmem:[%s303 + $0x3c] sm:$0xf]
        %v353 = vld [vmem:[%s303 + $0x40] sm:$0xf]
        %v354 = vld [vmem:[%s303 + $0x44] sm:$0xf]
        %v355 = vld [vmem:[%s303 + $0x48] sm:$0xf]
        %v356 = vld [vmem:[%s303 + $0x4c] sm:$0xf]
        %v357 = vld [vmem:[%s303 + $0x50] sm:$0xf]
        %v358 = vld [vmem:[%s303 + $0x54] sm:$0xf]
        %v359 = vld [vmem:[%s303 + $0x58] sm:$0xf]
        %v360 = vld [vmem:[%s303 + $0x5c] sm:$0xf]
        %v361 = vld [vmem:[%s303 + $0x60] sm:$0xf]
        %v362 = vld [vmem:[%s303 + $0x64] sm:$0xf]
        %v363 = vld [vmem:[%s303 + $0x68] sm:$0xf]
        %v364 = vld [vmem:[%s303 + $0x6c] sm:$0xf]
        %v365 = vld [vmem:[%s303 + $0x70] sm:$0xf]
        %v366 = vld [vmem:[%s303 + $0x74] sm:$0xf]
        %v367 = vld [vmem:[%s303 + $0x78] sm:$0xf]
        %v368 = vld [vmem:[%s303 + $0x7c] sm:$0xf]
        %v372 = vunpack.c.l.b16 %v331
        %v373 = vunpack.c.h.b16 %v331
        %v374 = vunpack.c.l.b16 %v332
        %v375 = vunpack.c.h.b16 %v332
        %v376 = vunpack.c.l.b16 %v333
        %v377 = vunpack.c.h.b16 %v333
        %v378 = vpack.c.b16 %v374, %v372
        %v379 = vpack.c.b16 %v375, %v373
        %v380 = vpack.c.b16 %v376, %v376
        %v381 = vpack.c.b16 %v377, %v377
        %v418 = vunpack.c.l.b16 %v337
        %v419 = vunpack.c.l.b16 %v338
        %v420 = vunpack.c.l.b16 %v339
        %v421 = vunpack.c.l.b16 %v340
        %v422 = vunpack.c.l.b16 %v341
        %v423 = vunpack.c.l.b16 %v342
        %v424 = vunpack.c.l.b16 %v343
        %v425 = vunpack.c.l.b16 %v344
        %v426 = vunpack.c.l.b16 %v345
        %v427 = vunpack.c.l.b16 %v346
        %v428 = vunpack.c.l.b16 %v347
        %v429 = vunpack.c.l.b16 %v348
        %v430 = vunpack.c.l.b16 %v349
        %v431 = vunpack.c.l.b16 %v350
        %v432 = vunpack.c.l.b16 %v351
        %v433 = vunpack.c.l.b16 %v352
        %v434 = vunpack.c.l.b16 %v353
        %v435 = vunpack.c.l.b16 %v354
        %v436 = vunpack.c.l.b16 %v355
        %v437 = vunpack.c.l.b16 %v356
        %v438 = vunpack.c.l.b16 %v357
        %v439 = vunpack.c.l.b16 %v358
        %v440 = vunpack.c.l.b16 %v359
        %v441 = vunpack.c.l.b16 %v360
        %v442 = vunpack.c.l.b16 %v361
        %v443 = vunpack.c.l.b16 %v362
        %v444 = vunpack.c.l.b16 %v363
        %v445 = vunpack.c.l.b16 %v364
        %v446 = vunpack.c.l.b16 %v365
        %v447 = vunpack.c.l.b16 %v366
        %v448 = vunpack.c.l.b16 %v367
        %v449 = vunpack.c.l.b16 %v368
        %v450 = vpack.c.b16 %v419, %v418
        %v451 = vpack.c.b16 %v421, %v420
        %v452 = vpack.c.b16 %v423, %v422
        %v453 = vpack.c.b16 %v425, %v424
        %v454 = vpack.c.b16 %v427, %v426
        %v455 = vpack.c.b16 %v429, %v428
        %v456 = vpack.c.b16 %v431, %v430
        %v457 = vpack.c.b16 %v433, %v432
        %v458 = vpack.c.b16 %v435, %v434
        %v459 = vpack.c.b16 %v437, %v436
        %v460 = vpack.c.b16 %v439, %v438
        %v461 = vpack.c.b16 %v441, %v440
        %v462 = vpack.c.b16 %v443, %v442
        %v463 = vpack.c.b16 %v445, %v444
        %v464 = vpack.c.b16 %v447, %v446
        %v465 = vpack.c.b16 %v449, %v448
        %482 = vmatpush.bf16.msra.mxu0 %v457
        %483 = vmatpush.bf16.msra.mxu0 %v456
        %484 = vmatpush.bf16.msra.mxu0 %v455
        %485 = vmatpush.bf16.msra.mxu0 %v454
        %486 = vmatpush.bf16.msra.mxu0 %v453
        %487 = vmatpush.bf16.msra.mxu0 %v452
        %488 = vmatpush.bf16.msra.mxu0 %v451
        %489 = vmatpush.bf16.msra.mxu0 %v450
        %490 = vmatmul.bf16.gmra.mxu0 %v378
        %v491 = vpop.f32.mrf.mxu0
        %v492 = vadd.f32 0.0, %v491
        %v493 = vpop.f32.mrf.mxu0
        %v494 = vadd.f32 0.0, %v493
        %495 = vmatmul.bf16.gmra.mxu0 %v380
        %v496 = vpop.f32.mrf.mxu0
        %v497 = vadd.f32 0.0, %v496
        %v498 = vpop.f32.mrf.mxu0
        %499 = vdwg.mxu0
        %500 = vmatpush.bf16.msra.mxu0 %v465
        %501 = vmatpush.bf16.msra.mxu0 %v464
        %502 = vmatpush.bf16.msra.mxu0 %v463
        %503 = vmatpush.bf16.msra.mxu0 %v462
        %504 = vmatpush.bf16.msra.mxu0 %v461
        %505 = vmatpush.bf16.msra.mxu0 %v460
        %506 = vmatpush.bf16.msra.mxu0 %v459
        %507 = vmatpush.bf16.msra.mxu0 %v458
        %508 = vmatmul.bf16.gmra.mxu0 %v379
        %v509 = vpop.f32.mrf.mxu0
        %v510 = vadd.f32 %v492, %v509
        %v511 = vpop.f32.mrf.mxu0
        %v512 = vadd.f32 %v494, %v511
        %513 = vmatmul.bf16.gmra.mxu0 %v381
        %v514 = vpop.f32.mrf.mxu0
        %v515 = vadd.f32 %v497, %v514
        %v516 = vpop.f32.mrf.mxu0
        %517 = vdwg.mxu0
        %v518 = vadd.f32 %v334, %v510
        %v519 = vadd.f32 %v335, %v512
        %v520 = vadd.f32 %v336, %v515
        %vm521 = vcmask 23552
        %522 = vst.msk [vmem:[%s319] sm:$0xff] %vm521, %v518
        %523 = vst.msk [vmem:[%s319 + $0x8] sm:$0xff] %vm521, %v519
        %524 = vst.msk [vmem:[%s319 + $0x10] sm:$0xff] %vm521, %v520
        %v525 = vld [vmem:[%s293] sm:$0xff]
        %v526 = vld [vmem:[%s293 + $0x8] sm:$0xff]
        %v527 = vld [vmem:[%s293 + $0x10] sm:$0xff]
        %v528 = vld [vmem:[%s313] sm:$0xf]
        %v529 = vld [vmem:[%s313 + $0x4] sm:$0xf]
        %v530 = vld [vmem:[%s313 + $0x8] sm:$0xf]
        %v531 = vld [vmem:[%s313 + $0xc] sm:$0xf]
        %v532 = vld [vmem:[%s313 + $0x10] sm:$0xf]
        %v533 = vld [vmem:[%s313 + $0x14] sm:$0xf]
        %v534 = vld [vmem:[%s313 + $0x18] sm:$0xf]
        %v535 = vld [vmem:[%s313 + $0x1c] sm:$0xf]
        %v536 = vld [vmem:[%s313 + $0x20] sm:$0xf]
        %v537 = vld [vmem:[%s313 + $0x24] sm:$0xf]
        %v538 = vld [vmem:[%s313 + $0x28] sm:$0xf]
        %v539 = vld [vmem:[%s313 + $0x2c] sm:$0xf]
        %v540 = vld [vmem:[%s313 + $0x30] sm:$0xf]
        %v541 = vld [vmem:[%s313 + $0x34] sm:$0xf]
        %v542 = vld [vmem:[%s313 + $0x38] sm:$0xf]
        %v543 = vld [vmem:[%s313 + $0x3c] sm:$0xf]
        %v544 = vld [vmem:[%s313 + $0x40] sm:$0xf]
        %v545 = vld [vmem:[%s313 + $0x44] sm:$0xf]
        %v546 = vld [vmem:[%s313 + $0x48] sm:$0xf]
        %v547 = vld [vmem:[%s313 + $0x4c] sm:$0xf]
        %v548 = vld [vmem:[%s313 + $0x50] sm:$0xf]
        %v549 = vld [vmem:[%s313 + $0x54] sm:$0xf]
        %v550 = vld [vmem:[%s313 + $0x58] sm:$0xf]
        %v551 = vld [vmem:[%s313 + $0x5c] sm:$0xf]
        %v552 = vld [vmem:[%s313 + $0x60] sm:$0xf]
        %v553 = vld [vmem:[%s313 + $0x64] sm:$0xf]
        %v554 = vld [vmem:[%s313 + $0x68] sm:$0xf]
        %v555 = vld [vmem:[%s313 + $0x6c] sm:$0xf]
        %v556 = vld [vmem:[%s313 + $0x70] sm:$0xf]
        %v557 = vld [vmem:[%s313 + $0x74] sm:$0xf]
        %v558 = vld [vmem:[%s313 + $0x78] sm:$0xf]
        %v559 = vld [vmem:[%s313 + $0x7c] sm:$0xf]
        %v592 = vunpack.c.l.b16 %v528
        %v593 = vunpack.c.l.b16 %v529
        %v594 = vunpack.c.l.b16 %v530
        %v595 = vunpack.c.l.b16 %v531
        %v596 = vunpack.c.l.b16 %v532
        %v597 = vunpack.c.l.b16 %v533
        %v598 = vunpack.c.l.b16 %v534
        %v599 = vunpack.c.l.b16 %v535
        %v600 = vunpack.c.l.b16 %v536
        %v601 = vunpack.c.l.b16 %v537
        %v602 = vunpack.c.l.b16 %v538
        %v603 = vunpack.c.l.b16 %v539
        %v604 = vunpack.c.l.b16 %v540
        %v605 = vunpack.c.l.b16 %v541
        %v606 = vunpack.c.l.b16 %v542
        %v607 = vunpack.c.l.b16 %v543
        %v608 = vunpack.c.l.b16 %v544
        %v609 = vunpack.c.l.b16 %v545
        %v610 = vunpack.c.l.b16 %v546
        %v611 = vunpack.c.l.b16 %v547
        %v612 = vunpack.c.l.b16 %v548
        %v613 = vunpack.c.l.b16 %v549
        %v614 = vunpack.c.l.b16 %v550
        %v615 = vunpack.c.l.b16 %v551
        %v616 = vunpack.c.l.b16 %v552
        %v617 = vunpack.c.l.b16 %v553
        %v618 = vunpack.c.l.b16 %v554
        %v619 = vunpack.c.l.b16 %v555
        %v620 = vunpack.c.l.b16 %v556
        %v621 = vunpack.c.l.b16 %v557
        %v622 = vunpack.c.l.b16 %v558
        %v623 = vunpack.c.l.b16 %v559
        %v624 = vpack.c.b16 %v593, %v592
        %v625 = vpack.c.b16 %v595, %v594
        %v626 = vpack.c.b16 %v597, %v596
        %v627 = vpack.c.b16 %v599, %v598
        %v628 = vpack.c.b16 %v601, %v600
        %v629 = vpack.c.b16 %v603, %v602
        %v630 = vpack.c.b16 %v605, %v604
        %v631 = vpack.c.b16 %v607, %v606
        %v632 = vpack.c.b16 %v609, %v608
        %v633 = vpack.c.b16 %v611, %v610
        %v634 = vpack.c.b16 %v613, %v612
        %v635 = vpack.c.b16 %v615, %v614
        %v636 = vpack.c.b16 %v617, %v616
        %v637 = vpack.c.b16 %v619, %v618
        %v638 = vpack.c.b16 %v621, %v620
        %v639 = vpack.c.b16 %v623, %v622
        %656 = vmatpush.bf16.msra.mxu0 %v631
        %657 = vmatpush.bf16.msra.mxu0 %v630
        %658 = vmatpush.bf16.msra.mxu0 %v629
        %659 = vmatpush.bf16.msra.mxu0 %v628
        %660 = vmatpush.bf16.msra.mxu0 %v627
        %661 = vmatpush.bf16.msra.mxu0 %v626
        %662 = vmatpush.bf16.msra.mxu0 %v625
        %663 = vmatpush.bf16.msra.mxu0 %v624
        %664 = vmatmul.bf16.gmra.mxu0 %v378
        %v665 = vpop.f32.mrf.mxu0
        %v666 = vadd.f32 0.0, %v665
        %v667 = vpop.f32.mrf.mxu0
        %v668 = vadd.f32 0.0, %v667
        %669 = vmatmul.bf16.gmra.mxu0 %v380
        %v670 = vpop.f32.mrf.mxu0
        %v671 = vadd.f32 0.0, %v670
        %v672 = vpop.f32.mrf.mxu0
        %673 = vdwg.mxu0
        %674 = vmatpush.bf16.msra.mxu0 %v639
        %675 = vmatpush.bf16.msra.mxu0 %v638
        %676 = vmatpush.bf16.msra.mxu0 %v637
        %677 = vmatpush.bf16.msra.mxu0 %v636
        %678 = vmatpush.bf16.msra.mxu0 %v635
        %679 = vmatpush.bf16.msra.mxu0 %v634
        %680 = vmatpush.bf16.msra.mxu0 %v633
        %681 = vmatpush.bf16.msra.mxu0 %v632
        %682 = vmatmul.bf16.gmra.mxu0 %v379
        %v683 = vpop.f32.mrf.mxu0
        %v684 = vadd.f32 %v666, %v683
        %v685 = vpop.f32.mrf.mxu0
        %v686 = vadd.f32 %v668, %v685
        %687 = vmatmul.bf16.gmra.mxu0 %v381
        %v688 = vpop.f32.mrf.mxu0
        %v689 = vadd.f32 %v671, %v688
        %v690 = vpop.f32.mrf.mxu0
        %691 = vdwg.mxu0
        %v692 = vadd.f32 %v525, %v684
        %v693 = vadd.f32 %v526, %v686
        %v694 = vadd.f32 %v527, %v689
        %695 = vst [vmem:[%s293] sm:$0xff] %v692
        %696 = vst [vmem:[%s293 + $0x8] sm:$0xff] %v693
        %697 = vst [vmem:[%s293 + $0x10] sm:$0xff] %v694
        %p698 = scmp.lt.s32.totalorder %s26, 1
        %s699 = scalar_select %p698, %s26, 1
        %s700 = smul.addr %s699, 3
        %s701 = smul.addr %s700, 8
        %s702 = scalar_lea.vmem %s3, %s701
        %s703 = sand.u32 %s152, 1
        %s704 = scalar_lea.sflag [#allocation4], %s703
        %s705 = sand.u32 %s152, 1
        %s706 = smul.addr %s705, 24
        %s707 = scalar_lea.vmem [#allocation5], %s706
        // Predicated region
        $region41: #{tpu_custom_call.1} parent=31 // pred_check
          %p708 = pneg %p136
        $region42: #{tpu_custom_call.1} parent=31 // pred_check_branch
          %710 = sbr.rel (%p708) target = $region44
        $region43: #{tpu_custom_call.1} parent=31 // pred_region
          _
        $region44: #{tpu_custom_call.1} parent=31 // pred_fallthru
          _
        // Predicated region
        $region45: #{tpu_custom_call.1} parent=31 // pred_check
          %p711 = pneg %p162
        $region46: #{tpu_custom_call.1} parent=31 // pred_check_branch
          %713 = sbr.rel (%p711) target = $region48
        $region47: #{tpu_custom_call.1} parent=31 // pred_region
          %715 = vsyncadd %s704, 0
          %s716 = smul.addr %s26, 3
          %s717 = smul.addr %s716, 8
          %s718 = scalar_lea.hbm %s4, %s717
          %s719 = sshll.u32 %s707, 4
          %s720 = int_to_ptr.vmem [resolvable:$true] %s719
          %s721 = sshll.u32 %s718, 4
          %s722 = int_to_ptr.hbm [resolvable:$true] %s721
          %727 = dma.vmem_to_hbm [thread:$0]  %s720, 384, %s722, %s704, 128, 128, 8
        $region48: #{tpu_custom_call.1} parent=31 // pred_fallthru
          _
      $region32: #{tpu_custom_call.1} parent=5 // pred_fallthru
        _
      %p728 = scmp.le.s32.totalorder 2, %s17
      // Predicated region
      $region49: #{tpu_custom_call.1} parent=5 // pred_check
        %p729 = pneg %p728
      $region50: #{tpu_custom_call.1} parent=5 // pred_check_branch
        %731 = sbr.rel (%p729) target = $region52
      $region51: #{tpu_custom_call.1} parent=5 // pred_region
        %s732 = ssub.s32 %s17, 2
        // Predicated region
        $region53: #{tpu_custom_call.1} parent=51 // pred_check
          %p733 = pneg %p142
        $region54: #{tpu_custom_call.1} parent=51 // pred_check_branch
          %735 = sbr.rel (%p733) target = $region56
        $region55: #{tpu_custom_call.1} parent=51 // pred_region
          %p736 = scmp.lt.s32.totalorder %s28, 1
          %s737 = scalar_select %p736, %s28, 1
          %s738 = smul.addr %s737, 3
          %s739 = smul.addr %s738, 8
          %s740 = scalar_lea.vmem %s3, %s739
        $region56: #{tpu_custom_call.1} parent=51 // pred_fallthru
          _
        // Predicated region
        $region57: #{tpu_custom_call.1} parent=51 // pred_check
          %p741 = pneg %p168
        $region58: #{tpu_custom_call.1} parent=51 // pred_check_branch
          %743 = sbr.rel (%p741) target = $region60
        $region59: #{tpu_custom_call.1} parent=51 // pred_region
          %s744 = sand.u32 %s153, 1
          %s745 = scalar_lea.sflag [#allocation4], %s744
          %s746 = sand.u32 %s153, 1
          %s747 = smul.addr %s746, 24
          %s748 = scalar_lea.vmem [#allocation5], %s747
          %750 = dma.done %s745, 384
        $region60: #{tpu_custom_call.1} parent=51 // pred_fallthru
          _
      $region52: #{tpu_custom_call.1} parent=5 // pred_fallthru
        _
    $region6: #{tpu_custom_call.1} parent=1 // loop_footer
      %s21 = sadd.s32 1, %s17
    $region7: #{tpu_custom_call.1} parent=1 // loop_footer_branch
      %16 = sbr.rel target = $region3
    $region8: #{tpu_custom_call.1} parent=1 // loop_exit
      _
    %751 = vsyncpa [#allocation3], 1
    %s752 = scalar_lea.sflag [#allocation3], 1
    %753 = vsyncpa %s752, 1
    %754 = vsyncpa [#allocation4], 1
    %s755 = scalar_lea.sflag [#allocation4], 1
    %756 = vsyncpa %s755, 1

</llo_original>
